<compile_context>
chip_gen: v7x
topology: tpu7x:2x2x1
jax: 0.10.0
libtpu: 0.0.40
codegen_flags: <defaults>
</compile_context>

<pallas_src>
import functools

import jax
import jax.numpy as jnp
from jax.experimental import pallas as pl
from jax.experimental.pallas import tpu as pltpu


def _cnn_layer_norm_kernel(x_ref, g_ref, b_ref, o_ref, *, eps):
    # x_ref block: (BBC, F, TL).  Reduce over the F (sublane) axis; the length
    # axis stays in the lane dimension so loads/stores are lane-dense.
    x = x_ref[...].astype(jnp.float32)                           # (BBC, F, TL)
    mu = jnp.mean(x, axis=1, keepdims=True)                      # (BBC, 1, TL)
    var = jnp.mean(jnp.square(x - mu), axis=1, keepdims=True)    # biased variance
    inv = jax.lax.rsqrt(var + eps)                               # (BBC, 1, TL)
    y = (x - mu) * inv * g_ref[...] + b_ref[...]                 # g/b: (1, F, 1)
    o_ref[...] = y.astype(o_ref.dtype)


def _round_down_mult(x, m):
    return (x // m) * m


def cnn_layer_norm(x, gamma, beta, *, eps=1e-5):
    """CNNLayerNorm: LayerNorm over the feature axis of x = (B, C, F, L).

    Equivalent to x.transpose(2,3) -> nn.LayerNorm(F) -> transpose(2,3), with the
    transposes eliminated: normalization runs over the sublane axis in place.
    """
    B, C, Feat, L = x.shape
    BC = B * C
    x3 = x.reshape(BC, Feat, L)               # free reshape (merge leading dims)

    # ---- tile selection -----------------------------------------------------
    # ~4 MiB (f32) per block.  Sized with 4 B/elem even for sub-32-bit inputs so
    # the in-kernel f32 upcast temporary is budgeted too.
    TARGET_BLOCK_BYTES = 4 * 1024 * 1024
    row_bytes_full_L = Feat * L * 4

    if row_bytes_full_L <= TARGET_BLOCK_BYTES:
        # Full length fits in one lane chunk -> fully contiguous DMA per (row, f).
        TL = L
        BBC = max(1, min(BC, TARGET_BLOCK_BYTES // row_bytes_full_L))
    else:
        # One row over full L exceeds the budget: chunk L at a 128-aligned width.
        lane_budget = _round_down_mult(TARGET_BLOCK_BYTES // (Feat * 4), 128)
        TL = max(128, min(lane_budget, _round_down_mult(L, 128)))
        BBC = 1

    # Keep at least 2 blocks total so both v7x TensorCores get work.
    if pl.cdiv(BC, BBC) * pl.cdiv(L, TL) < 2 and BC >= 2:
        BBC = -(-BC // 2)

    grid = (pl.cdiv(BC, BBC), pl.cdiv(L, TL))

    g3 = gamma.reshape(1, Feat, 1).astype(jnp.float32)
    b3 = beta.reshape(1, Feat, 1).astype(jnp.float32)

    out = pl.pallas_call(
        functools.partial(_cnn_layer_norm_kernel, eps=eps),
        out_shape=jax.ShapeDtypeStruct((BC, Feat, L), x.dtype),
        grid_spec=pltpu.PrefetchScalarGridSpec(
            num_scalar_prefetch=0,
            grid=grid,
            in_specs=[
                pl.BlockSpec((BBC, Feat, TL), lambda i, j: (i, 0, j)),
                pl.BlockSpec((1, Feat, 1), lambda i, j: (0, 0, 0)),
                pl.BlockSpec((1, Feat, 1), lambda i, j: (0, 0, 0)),
            ],
            out_specs=pl.BlockSpec((BBC, Feat, TL), lambda i, j: (i, 0, j)),
        ),
        compiler_params=pltpu.CompilerParams(
            dimension_semantics=("parallel", "parallel"),
            vmem_limit_bytes=48 * 1024 * 1024,
        ),
    )(x3, g3, b3)

    return out.reshape(B, C, Feat, L)


# ------------------------------------ main ------------------------------------

if __name__ == "__main__":
    B, C, Feat, L = 2, 4, 16, 16

    key = jax.random.PRNGKey(0)
    kx, kg, kb = jax.random.split(key, 3)
    x = jax.random.normal(kx, (B, C, Feat, L), jnp.float32)
    gamma = 1.0 + 0.1 * jax.random.normal(kg, (Feat,), jnp.float32)
    beta = 0.1 * jax.random.normal(kb, (Feat,), jnp.float32)

    y = cnn_layer_norm(x, gamma, beta)
    y = jax.block_until_ready(y)

    # Pure-JAX reference of the PyTorch module (transpose -> LayerNorm -> transpose).
    xt = jnp.swapaxes(x, 2, 3)
    mu = jnp.mean(xt, axis=-1, keepdims=True)
    var = jnp.mean((xt - mu) ** 2, axis=-1, keepdims=True)
    ref = jnp.swapaxes((xt - mu) * jax.lax.rsqrt(var + 1e-5) * gamma + beta, 2, 3)

    assert y.shape == x.shape, y.shape
    assert bool(jnp.all(jnp.isfinite(y)))
    assert jnp.allclose(y, ref, atol=1e-5, rtol=1e-5), float(jnp.max(jnp.abs(y - ref)))
    print("KERNEL_OK")
</pallas_src>

<mosaic_0001>
module attributes {stable_mosaic.version = 11 : i64} {
  func.func @_cnn_layer_norm_kernel(%arg0: i32, %arg1: i32, %arg2: memref<4x16x16xf32, #tpu.memory_space<vmem>>, %arg3: memref<1x16x1xf32, #tpu.memory_space<vmem>>, %arg4: memref<1x16x1xf32, #tpu.memory_space<vmem>>, %arg5: memref<4x16x16xf32, #tpu.memory_space<vmem>>) attributes {dimension_semantics = [#tpu.dimension_semantics<parallel>, #tpu.dimension_semantics<parallel>], iteration_bounds = array<i64: 2, 1>, scalar_prefetch = 0 : i64, scratch_operands = 0 : i64, tpu.core_type = #tpu.core_type<tc>, window_params = [{transform_indices = @transform_0, window_bounds = array<i64: 4, 16, 16>}, {pipeline_mode = #tpu.pipeline_mode<synchronous>, transform_indices = @transform_1, window_bounds = array<i64: 1, 16, 1>}, {pipeline_mode = #tpu.pipeline_mode<synchronous>, transform_indices = @transform_2, window_bounds = array<i64: 1, 16, 1>}, {transform_indices = @transform_3, window_bounds = array<i64: 4, 16, 16>}]} {
    %c0 = arith.constant 0 : index
    %c0_0 = arith.constant 0 : index
    %c0_1 = arith.constant 0 : index
    %0 = vector.load %arg2[%c0, %c0_0, %c0_1] : memref<4x16x16xf32, #tpu.memory_space<vmem>>, vector<4x16x16xf32>
    %cst = arith.constant dense<0.000000e+00> : vector<4x16xf32>
    %1 = vector.multi_reduction <add>, %0, %cst [1] : vector<4x16x16xf32> to vector<4x16xf32>
    %2 = vector.shape_cast %1 : vector<4x16xf32> to vector<4x1x16xf32>
    %cst_2 = arith.constant 1.600000e+01 : f32
    %3 = vector.broadcast %cst_2 : f32 to vector<4x1x16xf32>
    %4 = arith.divf %2, %3 : vector<4x1x16xf32>
    %5 = vector.broadcast %4 : vector<4x1x16xf32> to vector<4x16x16xf32>
    %6 = arith.subf %0, %5 : vector<4x16x16xf32>
    %7 = arith.mulf %6, %6 : vector<4x16x16xf32>
    %cst_3 = arith.constant dense<0.000000e+00> : vector<4x16xf32>
    %8 = vector.multi_reduction <add>, %7, %cst_3 [1] : vector<4x16x16xf32> to vector<4x16xf32>
    %9 = vector.shape_cast %8 : vector<4x16xf32> to vector<4x1x16xf32>
    %cst_4 = arith.constant 1.600000e+01 : f32
    %10 = vector.broadcast %cst_4 : f32 to vector<4x1x16xf32>
    %11 = arith.divf %9, %10 : vector<4x1x16xf32>
    %cst_5 = arith.constant 9.99999974E-6 : f32
    %12 = vector.broadcast %cst_5 : f32 to vector<4x1x16xf32>
    %13 = arith.addf %11, %12 : vector<4x1x16xf32>
    %14 = math.rsqrt %13 : vector<4x1x16xf32>
    %15 = vector.broadcast %4 : vector<4x1x16xf32> to vector<4x16x16xf32>
    %16 = arith.subf %0, %15 : vector<4x16x16xf32>
    %17 = vector.broadcast %14 : vector<4x1x16xf32> to vector<4x16x16xf32>
    %18 = arith.mulf %16, %17 : vector<4x16x16xf32>
    %c0_6 = arith.constant 0 : index
    %c0_7 = arith.constant 0 : index
    %c0_8 = arith.constant 0 : index
    %19 = vector.load %arg3[%c0_6, %c0_7, %c0_8] : memref<1x16x1xf32, #tpu.memory_space<vmem>>, vector<1x16x1xf32>
    %20 = vector.broadcast %19 : vector<1x16x1xf32> to vector<4x16x16xf32>
    %21 = arith.mulf %18, %20 : vector<4x16x16xf32>
    %c0_9 = arith.constant 0 : index
    %c0_10 = arith.constant 0 : index
    %c0_11 = arith.constant 0 : index
    %22 = vector.load %arg4[%c0_9, %c0_10, %c0_11] : memref<1x16x1xf32, #tpu.memory_space<vmem>>, vector<1x16x1xf32>
    %23 = vector.broadcast %22 : vector<1x16x1xf32> to vector<4x16x16xf32>
    %24 = arith.addf %21, %23 : vector<4x16x16xf32>
    %c0_12 = arith.constant 0 : index
    %c0_13 = arith.constant 0 : index
    %c0_14 = arith.constant 0 : index
    %25 = vector.load %arg5[%c0_12, %c0_13, %c0_14] : memref<4x16x16xf32, #tpu.memory_space<vmem>>, vector<4x16x16xf32>
    tpu.vector_store %arg5[%c0_12, %c0_13, %c0_14], %24 {strides = array<i32>} : memref<4x16x16xf32, #tpu.memory_space<vmem>>, vector<4x16x16xf32>,
    return
  }
  func.func @transform_0(%arg0: i32, %arg1: i32) -> (i32, i32, i32) {
    %c0_i32 = arith.constant 0 : i32
    %c0_i32_0 = arith.constant 0 : i32
    return %arg0, %c0_i32, %arg1 : i32, i32, i32
  }
  func.func @transform_1(%arg0: i32, %arg1: i32) -> (i32, i32, i32) {
    %c0_i32 = arith.constant 0 : i32
    %c0_i32_0 = arith.constant 0 : i32
    %c0_i32_1 = arith.constant 0 : i32
    %c0_i32_2 = arith.constant 0 : i32
    return %c0_i32, %c0_i32_0, %c0_i32_1 : i32, i32, i32
  }
  func.func @transform_2(%arg0: i32, %arg1: i32) -> (i32, i32, i32) {
    %c0_i32 = arith.constant 0 : i32
    %c0_i32_0 = arith.constant 0 : i32
    %c0_i32_1 = arith.constant 0 : i32
    %c0_i32_2 = arith.constant 0 : i32
    return %c0_i32, %c0_i32_0, %c0_i32_1 : i32, i32, i32
  }
  func.func @transform_3(%arg0: i32, %arg1: i32) -> (i32, i32, i32) {
    %c0_i32 = arith.constant 0 : i32
    %c0_i32_0 = arith.constant 0 : i32
    return %arg0, %c0_i32, %arg1 : i32, i32, i32
  }
}

</mosaic_0001>

<llo_original>
// kernel: tpu_custom_call.1
$region0: #{tpu_custom_call.1}
  #allocation0 [shape = 'u32[]', space=smem, size = 0x4, offset = 0x4, fixed_abs, tag = 'smem constant byte address 0x4 - core index']
  #allocation1 [shape = 'u32[144,128]{1,0:T(1,128)}', space=vmem, size = 0x12000, scoped, tag = 'internal scratch']
  %s0 = inlined_call_operand.hbm [shape: f32[8,16,16], index: 0, kind: input, shape index: {}]
  %s1 = inlined_call_operand.vmem [shape: f32[1,16,1], index: 1, kind: input, shape index: {}]
  %s2 = inlined_call_operand.vmem [shape: f32[1,16,1], index: 2, kind: input, shape index: {}]
  %s3 = inlined_call_operand.hbm [shape: f32[8,16,16], index: 3, kind: output, shape index: {}]
  %s4 = sld [smem:[#allocation0]]
  $region49: #{tpu_custom_call.1} parent=0
    _
  %s6 = ssub.s32 1, %s4
  %s7 = scalar_select 0, %s6, %s4
  $region1: #{tpu_custom_call.1} parent=0
    #allocation2 [shape = 'u8[65536]{0}', space=vmem, size = 0x10000, scoped, tag = 'input window, operand 0']
    #allocation3 [shape = 's32[2]{0}', space=sflag, size = 0x8, scoped, tag = 'scoped memory for tpu_custom_call.1']
    #allocation4 [shape = 's32[2]{0}', space=sflag, size = 0x8, scoped, tag = 'scoped memory for tpu_custom_call.1']
    #allocation5 [shape = 'u8[65536]{0}', space=vmem, size = 0x10000, scoped, tag = 'output window, operand 0']
    %8 = vsyncpa [#allocation3], 0
    %s9 = scalar_lea.sflag [#allocation3], 1
    %10 = vsyncpa %s9, 0
    %11 = vsyncpa [#allocation4], 0
    %s12 = scalar_lea.sflag [#allocation4], 1
    %13 = vsyncpa %s12, 0
    loop: start=0, step=1, limit=4
    $region2: #{tpu_custom_call.1} parent=1 // loop_pre_header
      _
    $region3: #{tpu_custom_call.1} parent=1 // loop_header
      %s15 = sphi 0, %s19
      %p16 = scmp.ge.s32.totalorder %s15, 4
      %s22 = sphi 0, %s34
      %s23 = sphi 0, %s30
      %s24 = sphi 0, %s22
      %s25 = sphi 0, %s23
      %s26 = sphi 0, %s24
      %s27 = sphi 0, %s25
      %s39 = sphi 0, %s41
      %s42 = sphi 0, %s39
      %s43 = sphi 0, %s42
      %s59 = sphi 0, %s43
      %s63 = sphi 0, %s63
      %s65 = sphi 0, %s63
      %s66 = sphi 0, %s65
      %s80 = sphi 0, %s66
      %s84 = sphi 0, %s84
      %s86 = sphi 0, %s84
      %s87 = sphi 0, %s86
      %s101 = sphi 0, %s87
      %s109 = sphi 0, %s111
      %s112 = sphi 0, %s109
      %s113 = sphi 0, %s112
      %s129 = sphi 0, %s113
    $region4: #{tpu_custom_call.1} parent=1 // loop_header_branch
      %18 = sbr.rel (%p16) target = $region8
    $region5: #{tpu_custom_call.1} parent=1 // loop_body
      %s20 = ssub.s32 %s15, 1
      %s21 = ssub.s32 %s15, 2
      %s28 = sadd.s32 1, %s23
      %p29 = scmp.ge.s32.totalorder %s28, 1
      %s30 = scalar_select %p29, 0, %s28
      %s31 = sadd.s32 1, %s22
      %s32 = scalar_select %p29, %s31, %s22
      %p33 = scmp.ge.s32.totalorder %s32, 2
      %s34 = scalar_select %p33, 0, %s32
      %s35 = ssub.s32 %s22, %s34
      %s36 = ssub.s32 %s23, %s30
      %s37 = sor.u32 %s35, %s36
      %p38 = scmp.eq.s32.totalorder %s37, 0
      %s40 = sadd.s32 %s39, 1
      %s41 = scalar_select %p38, %s39, %s40
      %p44 = pneg %p38
      %p45 = scmp.eq.s32.totalorder %s15, 1
      %p46 = por %p44, %p45
      %p47 = scmp.ne.s32.totalorder %s39, %s42
      %p48 = scmp.eq.s32.totalorder %s15, 0
      %p49 = por %p47, %p48
      %p50 = scmp.ne.s32.totalorder %s39, %s42
      %p51 = scmp.eq.s32.totalorder %s20, 1
      %p52 = por %p50, %p51
      %p53 = scmp.ne.s32.totalorder %s42, %s43
      %p54 = scmp.eq.s32.totalorder %s20, 0
      %p55 = por %p53, %p54
      %p56 = scmp.ne.s32.totalorder %s42, %s43
      %p57 = scmp.eq.s32.totalorder %s21, 1
      %p58 = por %p56, %p57
      %p60 = scmp.ne.s32.totalorder %s43, %s59
      %p61 = scmp.eq.s32.totalorder %s21, 0
      %p62 = por %p60, %p61
      %s64 = sadd.s32 %s63, 1
      %p67 = scmp.eq.s32.totalorder %s15, 1
      %p68 = scmp.ne.s32.totalorder %s63, %s65
      %p69 = scmp.eq.s32.totalorder %s15, 0
      %p70 = por %p68, %p69
      %p71 = scmp.ne.s32.totalorder %s63, %s65
      %p72 = scmp.eq.s32.totalorder %s20, 1
      %p73 = por %p71, %p72
      %p74 = scmp.ne.s32.totalorder %s65, %s66
      %p75 = scmp.eq.s32.totalorder %s20, 0
      %p76 = por %p74, %p75
      %p77 = scmp.ne.s32.totalorder %s65, %s66
      %p78 = scmp.eq.s32.totalorder %s21, 1
      %p79 = por %p77, %p78
      %p81 = scmp.ne.s32.totalorder %s66, %s80
      %p82 = scmp.eq.s32.totalorder %s21, 0
      %p83 = por %p81, %p82
      %s85 = sadd.s32 %s84, 1
      %p88 = scmp.eq.s32.totalorder %s15, 1
      %p89 = scmp.ne.s32.totalorder %s84, %s86
      %p90 = scmp.eq.s32.totalorder %s15, 0
      %p91 = por %p89, %p90
      %p92 = scmp.ne.s32.totalorder %s84, %s86
      %p93 = scmp.eq.s32.totalorder %s20, 1
      %p94 = por %p92, %p93
      %p95 = scmp.ne.s32.totalorder %s86, %s87
      %p96 = scmp.eq.s32.totalorder %s20, 0
      %p97 = por %p95, %p96
      %p98 = scmp.ne.s32.totalorder %s86, %s87
      %p99 = scmp.eq.s32.totalorder %s21, 1
      %p100 = por %p98, %p99
      %p102 = scmp.ne.s32.totalorder %s87, %s101
      %p103 = scmp.eq.s32.totalorder %s21, 0
      %p104 = por %p102, %p103
      %s105 = ssub.s32 %s22, %s34
      %s106 = ssub.s32 %s23, %s30
      %s107 = sor.u32 %s105, %s106
      %p108 = scmp.eq.s32.totalorder %s107, 0
      %s110 = sadd.s32 %s109, 1
      %s111 = scalar_select %p108, %s109, %s110
      %p114 = pneg %p108
      %p115 = scmp.eq.s32.totalorder %s15, 1
      %p116 = por %p114, %p115
      %p117 = scmp.ne.s32.totalorder %s109, %s112
      %p118 = scmp.eq.s32.totalorder %s15, 0
      %p119 = por %p117, %p118
      %p120 = scmp.ne.s32.totalorder %s109, %s112
      %p121 = scmp.eq.s32.totalorder %s20, 1
      %p122 = por %p120, %p121
      %p123 = scmp.ne.s32.totalorder %s112, %s113
      %p124 = scmp.eq.s32.totalorder %s20, 0
      %p125 = por %p123, %p124
      %p126 = scmp.ne.s32.totalorder %s112, %s113
      %p127 = scmp.eq.s32.totalorder %s21, 1
      %p128 = por %p126, %p127
      %p130 = scmp.ne.s32.totalorder %s113, %s129
      %p131 = scmp.eq.s32.totalorder %s21, 0
      %p132 = por %p130, %p131
      %p133 = scmp.le.s32.totalorder 1, %s15
      %p134 = scmp.lt.s32.totalorder %s15, 3
      %p135 = pnand %p133, %p134
      %p136 = pneg %p135
      // Predicated region
      $region9: #{tpu_custom_call.1} parent=5 // pred_check
        _
      $region10: #{tpu_custom_call.1} parent=5 // pred_check_branch
        %138 = sbr.rel (%p135) target = $region12
      $region11: #{tpu_custom_call.1} parent=5 // pred_region
        %s139 = ssub.s32 %s15, 1
        // Predicated region
        $region13: #{tpu_custom_call.1} parent=11 // pred_check
          %p140 = pneg %p76
        $region14: #{tpu_custom_call.1} parent=11 // pred_check_branch
          %142 = sbr.rel (%p140) target = $region16
        $region15: #{tpu_custom_call.1} parent=11 // pred_region
          _
        $region16: #{tpu_custom_call.1} parent=11 // pred_fallthru
          _
        // Predicated region
        $region17: #{tpu_custom_call.1} parent=11 // pred_check
          %p143 = pneg %p97
        $region18: #{tpu_custom_call.1} parent=11 // pred_check_branch
          %145 = sbr.rel (%p143) target = $region20
        $region19: #{tpu_custom_call.1} parent=11 // pred_region
          _
        $region20: #{tpu_custom_call.1} parent=11 // pred_fallthru
          _
      $region12: #{tpu_custom_call.1} parent=5 // pred_fallthru
        _
      %p146 = scmp.lt.s32.totalorder %s15, 2
      // Predicated region
      $region21: #{tpu_custom_call.1} parent=5 // pred_check
        %p147 = pneg %p146
      $region22: #{tpu_custom_call.1} parent=5 // pred_check_branch
        %149 = sbr.rel (%p147) target = $region24
      $region23: #{tpu_custom_call.1} parent=5 // pred_region
        // Predicated region
        $region25: #{tpu_custom_call.1} parent=23 // pred_check
          %p150 = pneg %p49
        $region26: #{tpu_custom_call.1} parent=23 // pred_check_branch
          %152 = sbr.rel (%p150) target = $region28
        $region27: #{tpu_custom_call.1} parent=23 // pred_region
          %s153 = sand.u32 %s39, 1
          %s154 = scalar_lea.sflag [#allocation3], %s153
          %s155 = sand.u32 %s39, 1
          %s156 = smul.addr %s155, 64
          %s157 = scalar_lea.vmem [#allocation2], %s156
          %s158 = smul.u32 4, %s22
          %s160 = ssub.s32 1024, 1024
          %161 = vsyncadd %s154, %s160
          %s162 = smul.addr %s158, 2
          %s163 = sadd.s32 %s23, %s162
          %s164 = smul.addr %s163, 128
          %s165 = scalar_lea.hbm %s0, %s164
          %s166 = sshll.u32 %s157, 4
          %s167 = int_to_ptr.vmem [resolvable:$true] %s166
          %172 = dma.hbm_to_vmem [thread:$0]  %s165, 1024, %s167, %s154, 128, 128, 8
        $region28: #{tpu_custom_call.1} parent=23 // pred_fallthru
          _
      $region24: #{tpu_custom_call.1} parent=5 // pred_fallthru
        _
      %p173 = scmp.le.s32.totalorder 1, %s15
      %p174 = scmp.lt.s32.totalorder %s15, 3
      %p175 = pnand %p173, %p174
      %p176 = pneg %p175
      // Predicated region
      $region29: #{tpu_custom_call.1} parent=5 // pred_check
        _
      $region30: #{tpu_custom_call.1} parent=5 // pred_check_branch
        %178 = sbr.rel (%p175) target = $region32
      $region31: #{tpu_custom_call.1} parent=5 // pred_region
        %s179 = ssub.s32 %s15, 1
        %s180 = sand.u32 %s42, 1
        %s181 = scalar_lea.sflag [#allocation3], %s180
        %s182 = sand.u32 %s42, 1
        %s183 = smul.addr %s182, 64
        %s184 = scalar_lea.vmem [#allocation2], %s183
        // Predicated region
        $region33: #{tpu_custom_call.1} parent=31 // pred_check
          %p185 = pneg %p55
        $region34: #{tpu_custom_call.1} parent=31 // pred_check_branch
          %187 = sbr.rel (%p185) target = $region36
        $region35: #{tpu_custom_call.1} parent=31 // pred_region
          %188 = dma.done %s181, 1024
        $region36: #{tpu_custom_call.1} parent=31 // pred_fallthru
          _
        %s189 = sand.u32 %s42, 1
        %s190 = scalar_lea.sflag [#allocation3], %s189
        %s191 = sand.u32 %s42, 1
        %s192 = smul.addr %s191, 64
        %s193 = scalar_lea.vmem [#allocation2], %s192
        %p194 = pneg %p55
        %p195 = pneg %p52
        %p196 = pneg %p76
        %p197 = pneg %p73
        %p198 = pneg %p97
        %p199 = pneg %p94
        %p200 = pneg %p125
        %p201 = pneg %p122
        %s202 = sand.u32 %s112, 1
        %s203 = scalar_lea.sflag [#allocation4], %s202
        %s204 = sand.u32 %s112, 1
        %s205 = smul.addr %s204, 64
        %s206 = scalar_lea.vmem [#allocation5], %s205
        %s207 = smul.u32 4, %s24
        %s208 = smul.u32 4, %s24
        %v209 = vld [vmem:[%s184] sm:$0xff]
        %v210 = vld [vmem:[%s184 + $0x8] sm:$0xff]
        %v211 = vld [vmem:[%s184 + $0x10] sm:$0xff]
        %v212 = vld [vmem:[%s184 + $0x18] sm:$0xff]
        %v213 = vld [vmem:[%s184 + $0x20] sm:$0xff]
        %v214 = vld [vmem:[%s184 + $0x28] sm:$0xff]
        %v215 = vld [vmem:[%s184 + $0x30] sm:$0xff]
        %v216 = vld [vmem:[%s184 + $0x38] sm:$0xff]
        %vm217 = vcmask 130048
        %v218 = vsel %vm217, %v209, 0.0
        %v219 = vsel %vm217, %v210, 0.0
        %v220 = vadd.f32 %v218, %v219
        %v221 = vrot.slane %v220, 4
        %v222 = vadd.f32 %v220, %v221
        %v223 = vrot.slane %v222, 2
        %v224 = vadd.f32 %v222, %v223
        %v225 = vrot.slane %v224, 1
        %v226 = vadd.f32 %v224, %v225
        %v227 = vsel %vm217, %v211, 0.0
        %v228 = vsel %vm217, %v212, 0.0
        %v229 = vadd.f32 %v227, %v228
        %v230 = vrot.slane %v229, 4
        %v231 = vadd.f32 %v229, %v230
        %v232 = vrot.slane %v231, 2
        %v233 = vadd.f32 %v231, %v232
        %v234 = vrot.slane %v233, 1
        %v235 = vadd.f32 %v233, %v234
        %v236 = vsel %vm217, %v213, 0.0
        %v237 = vsel %vm217, %v214, 0.0
        %v238 = vadd.f32 %v236, %v237
        %v239 = vrot.slane %v238, 4
        %v240 = vadd.f32 %v238, %v239
        %v241 = vrot.slane %v240, 2
        %v242 = vadd.f32 %v240, %v241
        %v243 = vrot.slane %v242, 1
        %v244 = vadd.f32 %v242, %v243
        %v245 = vsel %vm217, %v215, 0.0
        %v246 = vsel %vm217, %v216, 0.0
        %v247 = vadd.f32 %v245, %v246
        %v248 = vrot.slane %v247, 4
        %v249 = vadd.f32 %v247, %v248
        %v250 = vrot.slane %v249, 2
        %v251 = vadd.f32 %v249, %v250
        %v252 = vrot.slane %v251, 1
        %v253 = vadd.f32 %v251, %v252
        %v254 = vrcp.pop 16.0
        %v255 = vmul.f32 %v226, %v254
        %v256 = vmul.f32 %v235, %v254
        %v257 = vmul.f32 %v244, %v254
        %v258 = vmul.f32 %v253, %v254
        %v259 = vsub.f32 %v209, %v255
        %v260 = vsub.f32 %v210, %v255
        %v261 = vsub.f32 %v211, %v256
        %v262 = vsub.f32 %v212, %v256
        %v263 = vsub.f32 %v213, %v257
        %v264 = vsub.f32 %v214, %v257
        %v265 = vsub.f32 %v215, %v258
        %v266 = vsub.f32 %v216, %v258
        %v267 = vmul.f32 %v259, %v259
        %v268 = vmul.f32 %v260, %v260
        %v269 = vmul.f32 %v261, %v261
        %v270 = vmul.f32 %v262, %v262
        %v271 = vmul.f32 %v263, %v263
        %v272 = vmul.f32 %v264, %v264
        %v273 = vmul.f32 %v265, %v265
        %v274 = vmul.f32 %v266, %v266
        %v275 = vsel %vm217, %v267, 0.0
        %v276 = vsel %vm217, %v268, 0.0
        %v277 = vadd.f32 %v275, %v276
        %v278 = vrot.slane %v277, 4
        %v279 = vadd.f32 %v277, %v278
        %v280 = vrot.slane %v279, 2
        %v281 = vadd.f32 %v279, %v280
        %v282 = vrot.slane %v281, 1
        %v283 = vadd.f32 %v281, %v282
        %v284 = vsel %vm217, %v269, 0.0
        %v285 = vsel %vm217, %v270, 0.0
        %v286 = vadd.f32 %v284, %v285
        %v287 = vrot.slane %v286, 4
        %v288 = vadd.f32 %v286, %v287
        %v289 = vrot.slane %v288, 2
        %v290 = vadd.f32 %v288, %v289
        %v291 = vrot.slane %v290, 1
        %v292 = vadd.f32 %v290, %v291
        %v293 = vsel %vm217, %v271, 0.0
        %v294 = vsel %vm217, %v272, 0.0
        %v295 = vadd.f32 %v293, %v294
        %v296 = vrot.slane %v295, 4
        %v297 = vadd.f32 %v295, %v296
        %v298 = vrot.slane %v297, 2
        %v299 = vadd.f32 %v297, %v298
        %v300 = vrot.slane %v299, 1
        %v301 = vadd.f32 %v299, %v300
        %v302 = vsel %vm217, %v273, 0.0
        %v303 = vsel %vm217, %v274, 0.0
        %v304 = vadd.f32 %v302, %v303
        %v305 = vrot.slane %v304, 4
        %v306 = vadd.f32 %v304, %v305
        %v307 = vrot.slane %v306, 2
        %v308 = vadd.f32 %v306, %v307
        %v309 = vrot.slane %v308, 1
        %v310 = vadd.f32 %v308, %v309
        %v311 = vmul.f32 %v283, %v254
        %v312 = vmul.f32 %v292, %v254
        %v313 = vmul.f32 %v301, %v254
        %v314 = vmul.f32 %v310, %v254
        %v315 = vadd.f32 %v311, 1e-05
        %v316 = vadd.f32 %v312, 1e-05
        %v317 = vadd.f32 %v313, 1e-05
        %v318 = vadd.f32 %v314, 1e-05
        %v319 = vrsqrt.pop %v315
        %v320 = vrsqrt.pop %v316
        %v321 = vrsqrt.pop %v317
        %v322 = vrsqrt.pop %v318
        %v323 = vmul.f32 %v259, %v319
        %v324 = vmul.f32 %v260, %v319
        %v325 = vmul.f32 %v261, %v320
        %v326 = vmul.f32 %v262, %v320
        %v327 = vmul.f32 %v263, %v321
        %v328 = vmul.f32 %v264, %v321
        %v329 = vmul.f32 %v265, %v322
        %v330 = vmul.f32 %v266, %v322
        %v331 = vld [vmem:[%s1] sm:$0xff]
        %v332 = vld [vmem:[%s1 + $0x8] sm:$0xff]
        %334 = vset.pattern.permute.xlu0 0
        %335 = vperm.xlu0 %334, %v331
        %v336 = vpop.permute.xlu0 %335
        %339 = vset.pattern.permute.xlu0 0
        %340 = vperm.xlu0 %339, %v332
        %v341 = vpop.permute.xlu0 %340
        %v343 = vmul.f32 %v323, %v336
        %v344 = vmul.f32 %v324, %v341
        %v345 = vmul.f32 %v325, %v336
        %v346 = vmul.f32 %v326, %v341
        %v347 = vmul.f32 %v327, %v336
        %v348 = vmul.f32 %v328, %v341
        %v349 = vmul.f32 %v329, %v336
        %v350 = vmul.f32 %v330, %v341
        %v351 = vld [vmem:[%s2] sm:$0xff]
        %v352 = vld [vmem:[%s2 + $0x8] sm:$0xff]
        %354 = vset.pattern.permute.xlu0 0
        %355 = vperm.xlu0 %354, %v351
        %v356 = vpop.permute.xlu0 %355
        %359 = vset.pattern.permute.xlu0 0
        %360 = vperm.xlu0 %359, %v352
        %v361 = vpop.permute.xlu0 %360
        %v363 = vadd.f32 %v343, %v356
        %v364 = vadd.f32 %v344, %v361
        %v365 = vadd.f32 %v345, %v356
        %v366 = vadd.f32 %v346, %v361
        %v367 = vadd.f32 %v347, %v356
        %v368 = vadd.f32 %v348, %v361
        %v369 = vadd.f32 %v349, %v356
        %v370 = vadd.f32 %v350, %v361
        %371 = vst.msk [vmem:[%s206] sm:$0xff] %vm217, %v363
        %372 = vst.msk [vmem:[%s206 + $0x8] sm:$0xff] %vm217, %v364
        %373 = vst.msk [vmem:[%s206 + $0x10] sm:$0xff] %vm217, %v365
        %374 = vst.msk [vmem:[%s206 + $0x18] sm:$0xff] %vm217, %v366
        %375 = vst.msk [vmem:[%s206 + $0x20] sm:$0xff] %vm217, %v367
        %376 = vst.msk [vmem:[%s206 + $0x28] sm:$0xff] %vm217, %v368
        %377 = vst.msk [vmem:[%s206 + $0x30] sm:$0xff] %vm217, %v369
        %378 = vst.msk [vmem:[%s206 + $0x38] sm:$0xff] %vm217, %v370
        %s379 = sand.u32 %s112, 1
        %s380 = scalar_lea.sflag [#allocation4], %s379
        %s381 = sand.u32 %s112, 1
        %s382 = smul.addr %s381, 64
        %s383 = scalar_lea.vmem [#allocation5], %s382
        // Predicated region
        $region37: #{tpu_custom_call.1} parent=31 // pred_check
          %p384 = pneg %p122
        $region38: #{tpu_custom_call.1} parent=31 // pred_check_branch
          %386 = sbr.rel (%p384) target = $region40
        $region39: #{tpu_custom_call.1} parent=31 // pred_region
          %s387 = smul.u32 4, %s24
          %s389 = ssub.s32 1024, 1024
          %390 = vsyncadd %s380, %s389
          %s391 = smul.addr %s387, 2
          %s392 = sadd.s32 %s25, %s391
          %s393 = smul.addr %s392, 128
          %s394 = scalar_lea.hbm %s3, %s393
          %s395 = sshll.u32 %s383, 4
          %s396 = int_to_ptr.vmem [resolvable:$true] %s395
          %401 = dma.vmem_to_hbm [thread:$0]  %s396, 1024, %s394, %s380, 128, 128, 8
        $region40: #{tpu_custom_call.1} parent=31 // pred_fallthru
          _
      $region32: #{tpu_custom_call.1} parent=5 // pred_fallthru
        _
      %p402 = scmp.le.s32.totalorder 2, %s15
      // Predicated region
      $region41: #{tpu_custom_call.1} parent=5 // pred_check
        %p403 = pneg %p402
      $region42: #{tpu_custom_call.1} parent=5 // pred_check_branch
        %405 = sbr.rel (%p403) target = $region44
      $region43: #{tpu_custom_call.1} parent=5 // pred_region
        %s406 = ssub.s32 %s15, 2
        // Predicated region
        $region45: #{tpu_custom_call.1} parent=43 // pred_check
          %p407 = pneg %p128
        $region46: #{tpu_custom_call.1} parent=43 // pred_check_branch
          %409 = sbr.rel (%p407) target = $region48
        $region47: #{tpu_custom_call.1} parent=43 // pred_region
          %s410 = sand.u32 %s113, 1
          %s411 = scalar_lea.sflag [#allocation4], %s410
          %s412 = sand.u32 %s113, 1
          %s413 = smul.addr %s412, 64
          %s414 = scalar_lea.vmem [#allocation5], %s413
          %415 = dma.done %s411, 1024
        $region48: #{tpu_custom_call.1} parent=43 // pred_fallthru
          _
      $region44: #{tpu_custom_call.1} parent=5 // pred_fallthru
        _
    $region6: #{tpu_custom_call.1} parent=1 // loop_footer
      %s19 = sadd.s32 1, %s15
    $region7: #{tpu_custom_call.1} parent=1 // loop_footer_branch
      %14 = sbr.rel target = $region3
    $region8: #{tpu_custom_call.1} parent=1 // loop_exit
      _
    %416 = vsyncpa [#allocation3], 1
    %s417 = scalar_lea.sflag [#allocation3], 1
    %418 = vsyncpa %s417, 1
    %419 = vsyncpa [#allocation4], 1
    %s420 = scalar_lea.sflag [#allocation4], 1
    %421 = vsyncpa %s420, 1

</llo_original>
